<compile_context>
chip_gen: v5e
topology: v5e:2x2
jax: 0.10.0
libtpu: 0.0.40
codegen_flags: <defaults>
</compile_context>

<pallas_src>
import functools

import jax
import jax.numpy as jnp
from jax.experimental import pallas as pl
from jax.experimental.pallas import tpu as pltpu

EPS = 1e-5
_LANES = 128


def _round_up(v, m):
    return (v + m - 1) // m * m


def _cdiv(a, b):
    return -(-a // b)


def _vmem_capacity_bytes():
    try:
        return int(pltpu.get_tpu_info().vmem_capacity_bytes)
    except Exception:
        return 64 * 1024 * 1024  # v7x per-core capacity; safe lower bound


# ----------------------------------------------------------------------------
# Fast path: fused single-pass kernel (whole N resident per channel tile).
# ----------------------------------------------------------------------------
def _bn1d_fused_kernel(x_ref, gamma_ref, beta_ref, o_ref, *, eps):
    # x_ref: (N, tc) channel tile in VMEM; gamma_ref / beta_ref: (1, tc) float32.
    n_rows = x_ref.shape[0]
    inv_n = jnp.float32(1.0 / n_rows)

    # TODO(synk): for bf16 inputs, a chunked (per-sublane-block) accumulation would
    # avoid materializing the full f32 temporary of the tile.
    xf = x_ref[...].astype(jnp.float32)

    # Single sweep for both per-channel moments (f32 accumulation).
    s = jnp.sum(xf, axis=0, keepdims=True)
    ss = jnp.sum(xf * xf, axis=0, keepdims=True)
    mean = s * inv_n
    # Biased variance (training-mode BatchNorm1d); clamp tiny negative cancellation.
    # TODO(synk): for extreme |mean|/std ratios a centered second pass (Welford-style)
    # would be more robust than E[x^2] - E[x]^2.
    var = jnp.maximum(ss * inv_n - mean * mean, 0.0)
    inv_std = jax.lax.rsqrt(var + eps)

    # Fuse normalize + affine into one per-channel scale/shift.
    scale = inv_std * gamma_ref[...]
    shift = beta_ref[...] - mean * scale
    o_ref[...] = (xf * scale + shift).astype(o_ref.dtype)


# ----------------------------------------------------------------------------
# Large-N fallback, pass 1: per-channel stats -> (scale, shift).
# Grid = (channel tiles [parallel], row tiles [arbitrary/reduction]).
# ----------------------------------------------------------------------------
def _bn1d_stats_kernel(x_ref, gamma_ref, beta_ref, ss_ref, sum_ref, sq_ref, *, eps, n_rows):
    n = pl.program_id(1)
    tn = x_ref.shape[0]

    @pl.when(n == 0)
    def _():
        sum_ref[...] = jnp.zeros_like(sum_ref)
        sq_ref[...] = jnp.zeros_like(sq_ref)

    xf = x_ref[...].astype(jnp.float32)
    # Mask rows of the (possibly partial) last row tile.
    row = n * tn + jax.lax.broadcasted_iota(jnp.int32, xf.shape, 0)
    xm = jnp.where(row < n_rows, xf, 0.0)
    sum_ref[...] += jnp.sum(xm, axis=0, keepdims=True)
    sq_ref[...] += jnp.sum(xm * xm, axis=0, keepdims=True)

    @pl.when(n == pl.num_programs(1) - 1)
    def _():
        inv_n = jnp.float32(1.0 / n_rows)
        mean = sum_ref[...] * inv_n
        var = jnp.maximum(sq_ref[...] * inv_n - mean * mean, 0.0)
        inv_std = jax.lax.rsqrt(var + eps)
        scale = inv_std * gamma_ref[...]
        shift = beta_ref[...] - mean * scale
        ss_ref[0:1, :] = scale
        ss_ref[1:2, :] = shift


# ----------------------------------------------------------------------------
# Large-N fallback, pass 2: elementwise x*scale + shift (fully parallel grid).
# ----------------------------------------------------------------------------
def _bn1d_apply_kernel(x_ref, ss_ref, o_ref):
    scale = ss_ref[0:1, :]
    shift = ss_ref[1:2, :]
    o_ref[...] = (x_ref[...].astype(jnp.float32) * scale + shift).astype(o_ref.dtype)


def batch_norm_1d(x, gamma, beta, *, eps=EPS, tiling_budget_bytes=None):
    """x: (B, T, C) or (B, C). Returns a same-shape tensor normalized per channel
    (channel = last dim) with batch statistics (training-mode BN), affine applied."""
    orig_shape = x.shape
    C = orig_shape[-1]
    x2d = x.reshape(-1, C)  # (N, C)
    N = x2d.shape[0]
    isz = jnp.dtype(x.dtype).itemsize

    cap = _vmem_capacity_bytes()
    vmem_limit = int(cap * 0.85)
    budget = int(cap * 0.70) if tiling_budget_bytes is None else int(tiling_budget_bytes)

    # Affine params stay float32 end-to-end (tiny, no reason to downcast).
    gamma_f = gamma.reshape(1, C).astype(jnp.float32)
    beta_f = beta.reshape(1, C).astype(jnp.float32)

    # ---- channel-tile selection & path choice --------------------------------
    c_ceil = _round_up(C, _LANES)
    cands = [c for c in (512, 256, 128) if c <= max(c_ceil, _LANES)]
    # Fused-kernel VMEM estimate: double-buffered input + output blocks plus
    # ~3 (N, tc) float32 working temporaries.
    fitting = [c for c in cands if N * c * (4 * isz + 12) + (1 << 16) <= budget]
    multi = [c for c in fitting if _cdiv(C, c) >= 2]  # >=2 grid steps: shards v7x TCs
    tc_single = multi[0] if multi else (fitting[0] if fitting else None)

    if tc_single is not None:
        # ------------------ fused single-pass path ----------------------------
        tc = tc_single
        num_c = _cdiv(C, tc)
        cpad = num_c * tc
        gpad = jnp.pad(gamma_f, ((0, 0), (0, cpad - C)))
        bpad = jnp.pad(beta_f, ((0, 0), (0, cpad - C)))

        out = pl.pallas_call(
            functools.partial(_bn1d_fused_kernel, eps=eps),
            out_shape=jax.ShapeDtypeStruct((N, C), x.dtype),
            grid_spec=pltpu.PrefetchScalarGridSpec(
                num_scalar_prefetch=0,
                grid=(num_c,),
                in_specs=[
                    pl.BlockSpec((N, tc), lambda c: (0, c)),
                    pl.BlockSpec((1, tc), lambda c: (0, c)),
                    pl.BlockSpec((1, tc), lambda c: (0, c)),
                ],
                out_specs=pl.BlockSpec((N, tc), lambda c: (0, c)),
            ),
            compiler_params=pltpu.CompilerParams(
                dimension_semantics=("parallel",),
                vmem_limit_bytes=vmem_limit,
            ),
            cost_estimate=pl.CostEstimate(
                flops=5 * N * C,
                transcendentals=C,
                bytes_accessed=2 * N * C * isz,
            ),
        )(x2d, gpad, bpad)
        # TODO(synk): running_mean / running_var momentum update is a training-time
        # buffer mutation side effect and is not materialized here.
        return out.reshape(orig_shape)

    # ------------------ two-pass fallback for large N --------------------------
    tc = 256 if c_ceil >= 512 else 128
    per_row = tc * (4 * isz + 8)  # apply pass: 2x in + 2x out buffers + f32 temp
    tn = (budget // per_row) // 8 * 8
    tn = max(8, min(tn, 4096, _round_up(N, 8)))

    num_c = _cdiv(C, tc)
    num_n = _cdiv(N, tn)
    cpad = num_c * tc
    gpad = jnp.pad(gamma_f, ((0, 0), (0, cpad - C)))
    bpad = jnp.pad(beta_f, ((0, 0), (0, cpad - C)))

    ss = pl.pallas_call(
        functools.partial(_bn1d_stats_kernel, eps=eps, n_rows=N),
        out_shape=jax.ShapeDtypeStruct((2, cpad), jnp.float32),
        grid_spec=pltpu.PrefetchScalarGridSpec(
            num_scalar_prefetch=0,
            grid=(num_c, num_n),
            in_specs=[
                pl.BlockSpec((tn, tc), lambda c, n: (n, c)),
                pl.BlockSpec((1, tc), lambda c, n: (0, c)),
                pl.BlockSpec((1, tc), lambda c, n: (0, c)),
            ],
            out_specs=pl.BlockSpec((2, tc), lambda c, n: (0, c)),
            scratch_shapes=[
                pltpu.VMEM((1, tc), jnp.float32),
                pltpu.VMEM((1, tc), jnp.float32),
            ],
        ),
        compiler_params=pltpu.CompilerParams(
            dimension_semantics=("parallel", "arbitrary"),
            vmem_limit_bytes=vmem_limit,
        ),
        cost_estimate=pl.CostEstimate(
            flops=3 * N * C,
            transcendentals=C,
            bytes_accessed=N * C * isz,
        ),
    )(x2d, gpad, bpad)

    out = pl.pallas_call(
        _bn1d_apply_kernel,
        out_shape=jax.ShapeDtypeStruct((N, C), x.dtype),
        grid_spec=pltpu.PrefetchScalarGridSpec(
            num_scalar_prefetch=0,
            grid=(num_c, num_n),
            in_specs=[
                pl.BlockSpec((tn, tc), lambda c, n: (n, c)),
                pl.BlockSpec((2, tc), lambda c, n: (0, c)),
            ],
            out_specs=pl.BlockSpec((tn, tc), lambda c, n: (n, c)),
        ),
        compiler_params=pltpu.CompilerParams(
            dimension_semantics=("parallel", "parallel"),
            vmem_limit_bytes=vmem_limit,
        ),
        cost_estimate=pl.CostEstimate(
            flops=2 * N * C,
            transcendentals=0,
            bytes_accessed=2 * N * C * isz,
        ),
    )(x2d, ss)
    # TODO(synk): running_mean / running_var momentum update not materialized here.
    return out.reshape(orig_shape)


if __name__ == "__main__":
    key = jax.random.PRNGKey(0)

    def reference(x, gamma, beta, eps=EPS):
        C = x.shape[-1]
        x2d = x.reshape(-1, C).astype(jnp.float32)
        mean = x2d.mean(axis=0)
        var = x2d.var(axis=0)  # biased, training-mode BN
        y = (x2d - mean) / jnp.sqrt(var + eps) * gamma + beta
        return y.reshape(x.shape).astype(x.dtype)

    # --- fused single-pass path (small N, C not a multiple of 128) -------------
    B, T, C = 2, 8, 32
    k1, k2 = jax.random.split(key)
    x = jax.random.normal(k1, (B, T, C), dtype=jnp.float32)
    gamma = jnp.ones((C,), dtype=jnp.float32)   # nn.BatchNorm1d weight init
    beta = jnp.zeros((C,), dtype=jnp.float32)   # nn.BatchNorm1d bias init
    y = batch_norm_1d(x, gamma, beta)
    jax.block_until_ready(y)
    ref = reference(x, gamma, beta)
    assert y.shape == x.shape
    assert jnp.allclose(y, ref, atol=1e-4, rtol=1e-5), float(jnp.max(jnp.abs(y - ref)))

    # --- two-pass fallback (forced via a tiny tiling budget; partial tiles on
    #     both the row and channel axes) ----------------------------------------
    B2, T2, C2 = 2, 50, 160
    x2 = jax.random.normal(k2, (B2, T2, C2), dtype=jnp.float32)
    gamma2 = 0.5 + jax.random.uniform(k1, (C2,), dtype=jnp.float32)
    beta2 = 0.1 * jax.random.normal(k2, (C2,), dtype=jnp.float32)
    y2 = batch_norm_1d(x2, gamma2, beta2, tiling_budget_bytes=200 * 1024)
    jax.block_until_ready(y2)
    ref2 = reference(x2, gamma2, beta2)
    assert y2.shape == x2.shape
    assert jnp.allclose(y2, ref2, atol=1e-4, rtol=1e-5), float(jnp.max(jnp.abs(y2 - ref2)))

    print("KERNEL_OK")
</pallas_src>

<mosaic_0001>
module attributes {stable_mosaic.version = 11 : i64} {
  func.func @_bn1d_fused_kernel(%arg0: i32, %arg1: memref<16x128xf32, #tpu.memory_space<vmem>>, %arg2: memref<1x128xf32, #tpu.memory_space<vmem>>, %arg3: memref<1x128xf32, #tpu.memory_space<vmem>>, %arg4: memref<16x128xf32, #tpu.memory_space<vmem>>) attributes {dimension_semantics = [#tpu.dimension_semantics<parallel>], iteration_bounds = array<i64: 1>, scalar_prefetch = 0 : i64, scratch_operands = 0 : i64, tpu.core_type = #tpu.core_type<tc>, window_params = [{transform_indices = @transform_0, window_bounds = array<i64: 16, 128>}, {transform_indices = @transform_1, window_bounds = array<i64: 1, 128>}, {transform_indices = @transform_2, window_bounds = array<i64: 1, 128>}, {transform_indices = @transform_3, window_bounds = array<i64: 16, 128>}]} {
    %c0 = arith.constant 0 : index
    %c0_0 = arith.constant 0 : index
    %0 = vector.load %arg1[%c0, %c0_0] : memref<16x128xf32, #tpu.memory_space<vmem>>, vector<16x128xf32>
    %cst = arith.constant dense<0.000000e+00> : vector<128xf32>
    %1 = vector.multi_reduction <add>, %0, %cst [0] : vector<16x128xf32> to vector<128xf32>
    %2 = vector.shape_cast %1 : vector<128xf32> to vector<1x128xf32>
    %3 = arith.mulf %0, %0 : vector<16x128xf32>
    %cst_1 = arith.constant dense<0.000000e+00> : vector<128xf32>
    %4 = vector.multi_reduction <add>, %3, %cst_1 [0] : vector<16x128xf32> to vector<128xf32>
    %5 = vector.shape_cast %4 : vector<128xf32> to vector<1x128xf32>
    %cst_2 = arith.constant 6.250000e-02 : f32
    %6 = vector.broadcast %cst_2 : f32 to vector<1x128xf32>
    %7 = arith.mulf %2, %6 : vector<1x128xf32>
    %cst_3 = arith.constant 6.250000e-02 : f32
    %8 = vector.broadcast %cst_3 : f32 to vector<1x128xf32>
    %9 = arith.mulf %5, %8 : vector<1x128xf32>
    %10 = arith.mulf %7, %7 : vector<1x128xf32>
    %11 = arith.subf %9, %10 : vector<1x128xf32>
    %cst_4 = arith.constant 0.000000e+00 : f32
    %12 = vector.broadcast %cst_4 : f32 to vector<1x128xf32>
    %13 = arith.maximumf %11, %12 : vector<1x128xf32>
    %cst_5 = arith.constant 9.99999974E-6 : f32
    %14 = vector.broadcast %cst_5 : f32 to vector<1x128xf32>
    %15 = arith.addf %13, %14 : vector<1x128xf32>
    %16 = math.rsqrt %15 : vector<1x128xf32>
    %c0_6 = arith.constant 0 : index
    %c0_7 = arith.constant 0 : index
    %17 = vector.load %arg2[%c0_6, %c0_7] : memref<1x128xf32, #tpu.memory_space<vmem>>, vector<1x128xf32>
    %18 = arith.mulf %16, %17 : vector<1x128xf32>
    %c0_8 = arith.constant 0 : index
    %c0_9 = arith.constant 0 : index
    %19 = vector.load %arg3[%c0_8, %c0_9] : memref<1x128xf32, #tpu.memory_space<vmem>>, vector<1x128xf32>
    %20 = arith.mulf %7, %18 : vector<1x128xf32>
    %21 = arith.subf %19, %20 : vector<1x128xf32>
    %22 = vector.broadcast %18 : vector<1x128xf32> to vector<16x128xf32>
    %23 = arith.mulf %0, %22 : vector<16x128xf32>
    %24 = vector.broadcast %21 : vector<1x128xf32> to vector<16x128xf32>
    %25 = arith.addf %23, %24 : vector<16x128xf32>
    %c0_10 = arith.constant 0 : index
    %c0_11 = arith.constant 0 : index
    %26 = vector.load %arg4[%c0_10, %c0_11] : memref<16x128xf32, #tpu.memory_space<vmem>>, vector<16x128xf32>
    tpu.vector_store %arg4[%c0_10, %c0_11], %25 {strides = array<i32>} : memref<16x128xf32, #tpu.memory_space<vmem>>, vector<16x128xf32>,
    return
  }
  func.func @transform_0(%arg0: i32) -> (i32, i32) {
    %c0_i32 = arith.constant 0 : i32
    %c0_i32_0 = arith.constant 0 : i32
    return %c0_i32, %arg0 : i32, i32
  }
  func.func @transform_1(%arg0: i32) -> (i32, i32) {
    %c0_i32 = arith.constant 0 : i32
    %c0_i32_0 = arith.constant 0 : i32
    return %c0_i32, %arg0 : i32, i32
  }
  func.func @transform_2(%arg0: i32) -> (i32, i32) {
    %c0_i32 = arith.constant 0 : i32
    %c0_i32_0 = arith.constant 0 : i32
    return %c0_i32, %arg0 : i32, i32
  }
  func.func @transform_3(%arg0: i32) -> (i32, i32) {
    %c0_i32 = arith.constant 0 : i32
    %c0_i32_0 = arith.constant 0 : i32
    return %c0_i32, %arg0 : i32, i32
  }
}

</mosaic_0001>

<llo_original>
// kernel: tpu_custom_call.1
$region0: #{tpu_custom_call.1}
  #allocation0 [shape = 'u32[]', space=smem, size = 0x4, offset = 0x4, fixed_abs, tag = 'smem constant byte address 0x4 - core index']
  #allocation1 [shape = 'u32[72,128]{1,0:T(1,128)}', space=vmem, size = 0x9000, scoped, tag = 'internal scratch']
  %s0 = inlined_call_operand.hbm [shape: f32[16,32], index: 0, kind: input, shape index: {}]
  %s1 = inlined_call_operand.hbm [shape: f32[1,128], index: 1, kind: input, shape index: {}]
  %s2 = inlined_call_operand.vmem [shape: f32[1,128], index: 2, kind: input, shape index: {}]
  %s3 = inlined_call_operand.hbm [shape: f32[16,32], index: 3, kind: output, shape index: {}]
  %s4 = sld [smem:[#allocation0]]
  $region30: #{tpu_custom_call.1} parent=0
    _
  %s6 = ssub.s32 1, %s4
  %s7 = scalar_select 0, %s6, %s4
  $region1: #{tpu_custom_call.1} parent=0
    #allocation2 [shape = 'u8[8192]{0}', space=vmem, size = 0x2000, scoped, tag = 'input window, operand 0, single buffered']
    #allocation3 [shape = 's32[1]{0}', space=sflag, size = 0x4, scoped, tag = 'scoped memory for tpu_custom_call.1']
    #allocation4 [shape = 's32[1]{0}', space=sflag, size = 0x4, scoped, tag = 'scoped memory for tpu_custom_call.1']
    #allocation5 [shape = 'u8[512]{0}', space=vmem, size = 0x400, scoped, tag = 'input window, operand 1, single buffered']
    #allocation6 [shape = 's32[1]{0}', space=sflag, size = 0x4, scoped, tag = 'scoped memory for tpu_custom_call.1']
    #allocation7 [shape = 'u8[8192]{0}', space=vmem, size = 0x2000, scoped, tag = 'output window, operand 0, single buffered']
    %8 = vsyncpa [#allocation3], 0
    %9 = vsyncpa [#allocation6], 0
    %10 = vsyncpa [#allocation4], 0
    // Predicated region
    $region2: #{tpu_custom_call.1} parent=1 // pred_check
      _
    $region3: #{tpu_custom_call.1} parent=1 // pred_check_branch
      %12 = sbr.rel (0) target = $region5
    $region4: #{tpu_custom_call.1} parent=1 // pred_region
      %14 = vsyncadd [#allocation3], 0
      %s15 = sshll.u32 %s0, 4
      %s16 = int_to_ptr.hbm [resolvable:$true] %s15
      %s17 = sshll.u32 [#allocation2], 4
      %s18 = int_to_ptr.vmem [resolvable:$true] %s17
      %23 = dma.hbm_to_vmem [thread:$0]  %s16, 256, %s18, [#allocation3], 128, 128, 8
    $region5: #{tpu_custom_call.1} parent=1 // pred_fallthru
      _
    // Predicated region
    $region6: #{tpu_custom_call.1} parent=1 // pred_check
      _
    $region7: #{tpu_custom_call.1} parent=1 // pred_check_branch
      %25 = sbr.rel (0) target = $region9
    $region8: #{tpu_custom_call.1} parent=1 // pred_region
      %27 = vsyncadd [#allocation6], 0
      %s29 = sshll.u32 %s1, 4
      %s30 = int_to_ptr.hbm [resolvable:$true] %s29
      %s31 = sshll.u32 [#allocation5], 4
      %s32 = int_to_ptr.vmem [resolvable:$true] %s31
      %34 = dma.hbm_to_vmem [thread:$0]  %s30, 16, %s32, [#allocation6]
    $region9: #{tpu_custom_call.1} parent=1 // pred_fallthru
      _
    // Predicated region
    $region10: #{tpu_custom_call.1} parent=1 // pred_check
      _
    $region11: #{tpu_custom_call.1} parent=1 // pred_check_branch
      %36 = sbr.rel (0) target = $region13
    $region12: #{tpu_custom_call.1} parent=1 // pred_region
      _
    $region13: #{tpu_custom_call.1} parent=1 // pred_fallthru
      _
    // Predicated region
    $region14: #{tpu_custom_call.1} parent=1 // pred_check
      _
    $region15: #{tpu_custom_call.1} parent=1 // pred_check_branch
      %38 = sbr.rel (0) target = $region17
    $region16: #{tpu_custom_call.1} parent=1 // pred_region
      %40 = dma.done [#allocation3], 256
    $region17: #{tpu_custom_call.1} parent=1 // pred_fallthru
      _
    // Predicated region
    $region18: #{tpu_custom_call.1} parent=1 // pred_check
      _
    $region19: #{tpu_custom_call.1} parent=1 // pred_check_branch
      %42 = sbr.rel (0) target = $region21
    $region20: #{tpu_custom_call.1} parent=1 // pred_region
      %44 = dma.done [#allocation6], 16
    $region21: #{tpu_custom_call.1} parent=1 // pred_fallthru
      _
    %v45 = vld [vmem:[#allocation2] sm:$0xff]
    %v46 = vld [vmem:[#allocation2 + $0x8] sm:$0xff]
    %v47 = vadd.f32 %v45, %v46
    %v48 = vrot.slane %v47, 4
    %v49 = vadd.f32 %v47, %v48
    %v50 = vrot.slane %v49, 2
    %v51 = vadd.f32 %v49, %v50
    %v52 = vrot.slane %v51, 1
    %v53 = vadd.f32 %v51, %v52
    %v54 = vmul.f32 %v45, %v45
    %v55 = vmul.f32 %v46, %v46
    %v56 = vadd.f32 %v54, %v55
    %v57 = vrot.slane %v56, 4
    %v58 = vadd.f32 %v56, %v57
    %v59 = vrot.slane %v58, 2
    %v60 = vadd.f32 %v58, %v59
    %v61 = vrot.slane %v60, 1
    %v62 = vadd.f32 %v60, %v61
    %v63 = vmul.f32 %v53, 0.0625
    %v64 = vmul.f32 %v62, 0.0625
    %v65 = vmul.f32 %v63, %v63
    %v66 = vsub.f32 %v64, %v65
    %v67 = vmax.f32 %v66, 0.0
    %v68 = vadd.f32 %v67, 1e-05
    %v69 = vrsqrt.pop %v68
    %v70 = vmul.f32 %v69, %v68
    %v71 = vmul.f32 %v70, %v69
    %v72 = vmul.f32 0.5, %v71
    %v73 = vsub.f32 1.5, %v72
    %v74 = vmul.f32 %v69, %v73
    %vm75 = vweird.f32 %v68
    %vm76 = vweird.f32 %v69
    %vm77 = vmor %vm75, %vm76
    %v78 = vsel %vm77, %v69, %v74
    %v79 = vld [vmem:[#allocation5] sm:$0x1]
    %v80 = vmul.f32 %v78, %v79
    %v81 = vld [vmem:[%s2] sm:$0x1]
    %v82 = vmul.f32 %v63, %v80
    %v83 = vsub.f32 %v81, %v82
    %v84 = vperm.slane %v80, 0
    %v85 = vmul.f32 %v45, %v84
    %v86 = vmul.f32 %v46, %v84
    %v88 = vperm.slane %v83, 0
    %v90 = vadd.f32 %v85, %v88
    %v91 = vadd.f32 %v86, %v88
    %92 = vst [vmem:[#allocation7] sm:$0xff] %v90
    %93 = vst [vmem:[#allocation7 + $0x8] sm:$0xff] %v91
    // Predicated region
    $region22: #{tpu_custom_call.1} parent=1 // pred_check
      _
    $region23: #{tpu_custom_call.1} parent=1 // pred_check_branch
      %95 = sbr.rel (0) target = $region25
    $region24: #{tpu_custom_call.1} parent=1 // pred_region
      %97 = vsyncadd [#allocation4], 0
      %s98 = sshll.u32 [#allocation7], 4
      %s99 = int_to_ptr.vmem [resolvable:$true] %s98
      %s100 = sshll.u32 %s3, 4
      %s101 = int_to_ptr.hbm [resolvable:$true] %s100
      %106 = dma.vmem_to_hbm [thread:$0]  %s99, 256, %s101, [#allocation4], 128, 128, 8
    $region25: #{tpu_custom_call.1} parent=1 // pred_fallthru
      _
    // Predicated region
    $region26: #{tpu_custom_call.1} parent=1 // pred_check
      _
    $region27: #{tpu_custom_call.1} parent=1 // pred_check_branch
      %108 = sbr.rel (0) target = $region29
    $region28: #{tpu_custom_call.1} parent=1 // pred_region
      %110 = dma.done [#allocation4], 256
    $region29: #{tpu_custom_call.1} parent=1 // pred_fallthru
      _
    %111 = vsyncpa [#allocation3], 1
    %112 = vsyncpa [#allocation6], 1
    %113 = vsyncpa [#allocation4], 1

</llo_original>
